<compile_context>
chip_gen: v5e
topology: v5e:2x2
jax: 0.10.0
libtpu: 0.0.40
codegen_flags: <defaults>
</compile_context>

<pallas_src>
import jax
import jax.numpy as jnp
from jax.experimental import pallas as pl
from jax.experimental.pallas import tpu as pltpu


def _round_up(n, m):
    return ((n + m - 1) // m) * m


def _classifier_kernel(x_ref, w1_ref, b1_ref, w2_ref, b2_ref, o_ref):
    """Fused MLP tile: relu(x @ W1 + b1) @ W2 + b2 (weights pre-transposed).

    x_ref  : (TB, E)   f32 activations (batch tile)
    w1_ref : (E, Hp)   bf16, pre-transposed, Hp = pad128(hidden_dim)
    b1_ref : (1, Hp)   f32
    w2_ref : (Hp, Tp)  bf16, pre-transposed, Tp = pad128(target_size)
    b2_ref : (1, Tp)   f32
    o_ref  : (TB, Tp)  f32 logits (lane-dense; padded columns are exactly 0)
    """
    x = x_ref[...].astype(jnp.bfloat16)

    # First linear: canonical (M,K)x(K,N) feed to the MXU, f32 accumulate.
    h = jnp.dot(x, w1_ref[...], preferred_element_type=jnp.float32)
    # Bias + ReLU in f32 on the VPU.
    h = jnp.maximum(h + b1_ref[...], 0.0)

    # Second linear.
    logit = jnp.dot(h.astype(jnp.bfloat16), w2_ref[...],
                    preferred_element_type=jnp.float32)
    o_ref[...] = (logit + b2_ref[...]).astype(o_ref.dtype)


def prepare_classifier_params(w1, b1, w2, b2, lane=128):
    """One-time parameter prep (do at init, NOT per forward call).

    Inputs use the nn.Linear (out, in) layout:
      w1 : (hidden_dim, embed_dim),  b1 : (hidden_dim,)
      w2 : (target_size, hidden_dim), b2 : (target_size,)

    Pads hidden_dim / target_size to multiples of 128 with zeros (padded h
    columns are relu(0 + 0) = 0 and contribute nothing; padded logit columns
    are exactly 0), TRANSPOSES the weights to (in, out) so the kernel does a
    plain x @ w, and stores weights as bf16 for the MXU.
    """
    H, E = w1.shape
    T, H2 = w2.shape
    assert H2 == H
    Hp = _round_up(H, lane)
    Tp = _round_up(T, lane)

    w1p = jnp.zeros((E, Hp), jnp.bfloat16).at[:, :H].set(w1.T.astype(jnp.bfloat16))
    b1p = jnp.zeros((1, Hp), jnp.float32).at[0, :H].set(b1.astype(jnp.float32))
    w2p = jnp.zeros((Hp, Tp), jnp.bfloat16).at[:H, :T].set(w2.T.astype(jnp.bfloat16))
    b2p = jnp.zeros((1, Tp), jnp.float32).at[0, :T].set(b2.astype(jnp.float32))
    return {"w1": w1p, "b1": b1p, "w2": w2p, "b2": b2p, "target_size": T}


def _pick_batch_tile(B):
    """Batch tile: multiple of 8, large enough to amortize per-step overhead,
    but guaranteeing >=2 grid steps for large batches (v7x megacore)."""
    b8 = _round_up(B, 8)
    if b8 <= 512:
        return b8                       # one step; don't shrink below 512 just to split
    # >=2 steps, TB in [512, 1024], multiple of 8.
    return max(512, min(1024, _round_up(pl.cdiv(B, 2), 8)))


def classifier_forward(x, params, return_padded=False):
    """Forward pass mirroring Classifier.forward.

    x : (B, embed_dim) float32
    returns (B, target_size) float32, or (B, Tp) if return_padded=True
    (padded logit columns are exactly 0 -- consumers may mask instead of slice
    to avoid an extra HBM pass over the logits).
    """
    w1, b1, w2, b2 = params["w1"], params["b1"], params["w2"], params["b2"]
    T = params["target_size"]
    B, E = x.shape
    Hp = w1.shape[1]
    Tp = w2.shape[1]

    TB = _pick_batch_tile(B)
    num_tiles = pl.cdiv(B, TB)

    flops = 2 * B * E * Hp + 2 * B * Hp * Tp
    bytes_accessed = (
        B * E * 4             # x (f32 in)
        + E * Hp * 2          # w1 (bf16)
        + Hp * 4              # b1 (f32)
        + Hp * Tp * 2         # w2 (bf16)
        + Tp * 4              # b2 (f32)
        + B * Tp * 4          # logits (f32 out)
    )

    def _call(single_buffer_weights):
        weight_bufs = 1 if single_buffer_weights else 2
        wmode = pl.Buffered(1) if single_buffer_weights else None
        # Explicit VMEM budget: streamed tiles (double-buffered) + resident
        # weights/biases + in-kernel intermediates, with 2x headroom.
        vmem_bytes = (
            2 * TB * E * 4                                     # x tiles
            + 2 * TB * Tp * 4                                  # out tiles
            + weight_bufs * ((E * Hp + Hp * Tp) * 2 + (Hp + Tp) * 4)
            + TB * Hp * 4 + TB * Tp * 4                        # h, logit temporaries
        )
        vmem_limit = int(min(100 * 1024 * 1024,
                             max(16 * 1024 * 1024, 2 * vmem_bytes)))

        return pl.pallas_call(
            _classifier_kernel,
            out_shape=jax.ShapeDtypeStruct((B, Tp), jnp.float32),
            grid=(num_tiles,),
            in_specs=[
                # x: streamed over the batch (ragged last block masked by Pallas).
                pl.BlockSpec((TB, E), lambda i: (i, 0)),
                # weights/biases: constant index -> VMEM-resident, single-buffered.
                pl.BlockSpec((E, Hp), lambda i: (0, 0), pipeline_mode=wmode),
                pl.BlockSpec((1, Hp), lambda i: (0, 0), pipeline_mode=wmode),
                pl.BlockSpec((Hp, Tp), lambda i: (0, 0), pipeline_mode=wmode),
                pl.BlockSpec((1, Tp), lambda i: (0, 0), pipeline_mode=wmode),
            ],
            out_specs=pl.BlockSpec((TB, Tp), lambda i: (i, 0)),
            compiler_params=pltpu.CompilerParams(
                dimension_semantics=("parallel",),   # v7x: shard batch over 2 TCs
                vmem_limit_bytes=vmem_limit,
            ),
            cost_estimate=pl.CostEstimate(
                flops=flops, transcendentals=0, bytes_accessed=bytes_accessed),
        )(x, w1, b1, w2, b2)

    try:
        out = _call(True)
    except Exception:
        # pl.Buffered(1) not accepted on this jax/libtpu version -> default
        # double-buffering for the resident weights (still never re-DMA'd).
        out = _call(False)

    if return_padded:
        return out
    return out[:, :T]


if __name__ == "__main__":
    # Shapes implied by the module: hidden = (batch, embed_dim)
    batch = 8
    embed_dim = 32      # args.embed_dim
    hidden_dim = 64     # args.hidden_dim
    target_size = 16    # target_size

    key = jax.random.PRNGKey(0)
    kx, kw1, kb1, kw2, kb2, kx2 = jax.random.split(key, 6)

    x = jax.random.normal(kx, (batch, embed_dim), dtype=jnp.float32)
    # Deterministic "init" matching nn.Linear parameter shapes (out, in).
    w1 = jax.random.normal(kw1, (hidden_dim, embed_dim), dtype=jnp.float32) * 0.1
    b1 = jax.random.normal(kb1, (hidden_dim,), dtype=jnp.float32) * 0.1
    w2 = jax.random.normal(kw2, (target_size, hidden_dim), dtype=jnp.float32) * 0.1
    b2 = jax.random.normal(kb2, (target_size,), dtype=jnp.float32) * 0.1

    # One-time parameter preparation (pad + transpose + bf16 cast), then forward.
    params = prepare_classifier_params(w1, b1, w2, b2)
    logits = classifier_forward(x, params)
    jax.block_until_ready(logits)

    # Pure-JAX f32 reference of the same math (kernel uses bf16 MXU operands,
    # so tolerance is loosened accordingly).
    ref = jnp.maximum(x @ w1.T + b1, 0.0) @ w2.T + b2
    assert logits.shape == (batch, target_size)
    assert jnp.allclose(logits, ref, atol=5e-2, rtol=5e-2), (
        float(jnp.max(jnp.abs(logits - ref))))

    # Ragged-batch check: exercises the pl.cdiv fringe (masked boundary block,
    # no wrapper-side pad/slice of the batch).
    x2 = jax.random.normal(kx2, (13, embed_dim), dtype=jnp.float32)
    logits2 = classifier_forward(x2, params)
    jax.block_until_ready(logits2)
    ref2 = jnp.maximum(x2 @ w1.T + b1, 0.0) @ w2.T + b2
    assert logits2.shape == (13, target_size)
    assert jnp.allclose(logits2, ref2, atol=5e-2, rtol=5e-2), (
        float(jnp.max(jnp.abs(logits2 - ref2))))

    print("KERNEL_OK")
</pallas_src>

<mosaic_0001>
module attributes {stable_mosaic.version = 11 : i64} {
  func.func @_classifier_kernel(%arg0: i32, %arg1: memref<8x32xf32, #tpu.memory_space<vmem>>, %arg2: memref<32x128xbf16, #tpu.memory_space<vmem>>, %arg3: memref<1x128xf32, #tpu.memory_space<vmem>>, %arg4: memref<128x128xbf16, #tpu.memory_space<vmem>>, %arg5: memref<1x128xf32, #tpu.memory_space<vmem>>, %arg6: memref<8x128xf32, #tpu.memory_space<vmem>>) attributes {dimension_semantics = [#tpu.dimension_semantics<parallel>], iteration_bounds = array<i64: 1>, scalar_prefetch = 0 : i64, scratch_operands = 0 : i64, tpu.core_type = #tpu.core_type<tc>, window_params = [{transform_indices = @transform_0, window_bounds = array<i64: 8, 32>}, {pipeline_mode = #tpu.pipeline_mode<synchronous>, transform_indices = @transform_1, window_bounds = array<i64: 32, 128>}, {pipeline_mode = #tpu.pipeline_mode<synchronous>, transform_indices = @transform_2, window_bounds = array<i64: 1, 128>}, {pipeline_mode = #tpu.pipeline_mode<synchronous>, transform_indices = @transform_3, window_bounds = array<i64: 128, 128>}, {pipeline_mode = #tpu.pipeline_mode<synchronous>, transform_indices = @transform_4, window_bounds = array<i64: 1, 128>}, {transform_indices = @transform_5, window_bounds = array<i64: 8, 128>}]} {
    %c0 = arith.constant 0 : index
    %c0_0 = arith.constant 0 : index
    %0 = vector.load %arg1[%c0, %c0_0] : memref<8x32xf32, #tpu.memory_space<vmem>>, vector<8x32xf32>
    %1 = arith.truncf %0 : vector<8x32xf32> to vector<8x32xbf16>
    %c0_1 = arith.constant 0 : index
    %c0_2 = arith.constant 0 : index
    %2 = vector.load %arg2[%c0_1, %c0_2] : memref<32x128xbf16, #tpu.memory_space<vmem>>, vector<32x128xbf16>
    %cst = arith.constant dense<0.000000e+00> : vector<8x128xf32>
    %3 = tpu.matmul %1, %2, %cst {dimension_numbers = #tpu.dot_dimension_numbers<[1], [0], [0], [1], [0, 0, 1, 1], [], []>} : vector<8x32xbf16>, vector<32x128xbf16>, vector<8x128xf32> -> vector<8x128xf32>
    %c0_3 = arith.constant 0 : index
    %c0_4 = arith.constant 0 : index
    %4 = vector.load %arg3[%c0_3, %c0_4] : memref<1x128xf32, #tpu.memory_space<vmem>>, vector<1x128xf32>
    %5 = vector.broadcast %4 : vector<1x128xf32> to vector<8x128xf32>
    %6 = arith.addf %3, %5 : vector<8x128xf32>
    %cst_5 = arith.constant 0.000000e+00 : f32
    %7 = vector.broadcast %cst_5 : f32 to vector<8x128xf32>
    %8 = arith.maximumf %6, %7 : vector<8x128xf32>
    %9 = arith.truncf %8 : vector<8x128xf32> to vector<8x128xbf16>
    %c0_6 = arith.constant 0 : index
    %c0_7 = arith.constant 0 : index
    %10 = vector.load %arg4[%c0_6, %c0_7] : memref<128x128xbf16, #tpu.memory_space<vmem>>, vector<128x128xbf16>
    %cst_8 = arith.constant dense<0.000000e+00> : vector<8x128xf32>
    %11 = tpu.matmul %9, %10, %cst_8 {dimension_numbers = #tpu.dot_dimension_numbers<[1], [0], [0], [1], [0, 0, 1, 1], [], []>} : vector<8x128xbf16>, vector<128x128xbf16>, vector<8x128xf32> -> vector<8x128xf32>
    %c0_9 = arith.constant 0 : index
    %c0_10 = arith.constant 0 : index
    %12 = vector.load %arg5[%c0_9, %c0_10] : memref<1x128xf32, #tpu.memory_space<vmem>>, vector<1x128xf32>
    %13 = vector.broadcast %12 : vector<1x128xf32> to vector<8x128xf32>
    %14 = arith.addf %11, %13 : vector<8x128xf32>
    %c0_11 = arith.constant 0 : index
    %c0_12 = arith.constant 0 : index
    %15 = vector.load %arg6[%c0_11, %c0_12] : memref<8x128xf32, #tpu.memory_space<vmem>>, vector<8x128xf32>
    tpu.vector_store %arg6[%c0_11, %c0_12], %14 {strides = array<i32>} : memref<8x128xf32, #tpu.memory_space<vmem>>, vector<8x128xf32>,
    return
  }
  func.func @transform_0(%arg0: i32) -> (i32, i32) {
    %c0_i32 = arith.constant 0 : i32
    %c0_i32_0 = arith.constant 0 : i32
    return %arg0, %c0_i32 : i32, i32
  }
  func.func @transform_1(%arg0: i32) -> (i32, i32) {
    %c0_i32 = arith.constant 0 : i32
    %c0_i32_0 = arith.constant 0 : i32
    %c0_i32_1 = arith.constant 0 : i32
    return %c0_i32, %c0_i32_0 : i32, i32
  }
  func.func @transform_2(%arg0: i32) -> (i32, i32) {
    %c0_i32 = arith.constant 0 : i32
    %c0_i32_0 = arith.constant 0 : i32
    %c0_i32_1 = arith.constant 0 : i32
    return %c0_i32, %c0_i32_0 : i32, i32
  }
  func.func @transform_3(%arg0: i32) -> (i32, i32) {
    %c0_i32 = arith.constant 0 : i32
    %c0_i32_0 = arith.constant 0 : i32
    %c0_i32_1 = arith.constant 0 : i32
    return %c0_i32, %c0_i32_0 : i32, i32
  }
  func.func @transform_4(%arg0: i32) -> (i32, i32) {
    %c0_i32 = arith.constant 0 : i32
    %c0_i32_0 = arith.constant 0 : i32
    %c0_i32_1 = arith.constant 0 : i32
    return %c0_i32, %c0_i32_0 : i32, i32
  }
  func.func @transform_5(%arg0: i32) -> (i32, i32) {
    %c0_i32 = arith.constant 0 : i32
    %c0_i32_0 = arith.constant 0 : i32
    return %arg0, %c0_i32 : i32, i32
  }
}

module attributes {stable_mosaic.version = 11 : i64} {
  func.func @_classifier_kernel(%arg0: i32, %arg1: memref<8x32xf32, #tpu.memory_space<vmem>>, %arg2: memref<32x128xbf16, #tpu.memory_space<vmem>>, %arg3: memref<1x128xf32, #tpu.memory_space<vmem>>, %arg4: memref<128x128xbf16, #tpu.memory_space<vmem>>, %arg5: memref<1x128xf32, #tpu.memory_space<vmem>>, %arg6: memref<8x128xf32, #tpu.memory_space<vmem>>) attributes {dimension_semantics = [#tpu.dimension_semantics<parallel>], iteration_bounds = array<i64: 1>, scalar_prefetch = 0 : i64, scratch_operands = 0 : i64, tpu.core_type = #tpu.core_type<tc>, window_params = [{transform_indices = @transform_0, window_bounds = array<i64: 8, 32>}, {pipeline_mode = #tpu.pipeline_mode<synchronous>, transform_indices = @transform_1, window_bounds = array<i64: 32, 128>}, {pipeline_mode = #tpu.pipeline_mode<synchronous>, transform_indices = @transform_2, window_bounds = array<i64: 1, 128>}, {pipeline_mode = #tpu.pipeline_mode<synchronous>, transform_indices = @transform_3, window_bounds = array<i64: 128, 128>}, {pipeline_mode = #tpu.pipeline_mode<synchronous>, transform_indices = @transform_4, window_bounds = array<i64: 1, 128>}, {transform_indices = @transform_5, window_bounds = array<i64: 8, 128>}]} {
    %c0 = arith.constant 0 : index
    %c0_0 = arith.constant 0 : index
    %0 = vector.load %arg1[%c0, %c0_0] : memref<8x32xf32, #tpu.memory_space<vmem>>, vector<8x32xf32>
    %1 = arith.truncf %0 : vector<8x32xf32> to vector<8x32xbf16>
    %c0_1 = arith.constant 0 : index
    %c0_2 = arith.constant 0 : index
    %2 = vector.load %arg2[%c0_1, %c0_2] : memref<32x128xbf16, #tpu.memory_space<vmem>>, vector<32x128xbf16>
    %cst = arith.constant dense<0.000000e+00> : vector<8x128xf32>
    %3 = tpu.matmul %1, %2, %cst {dimension_numbers = #tpu.dot_dimension_numbers<[1], [0], [0], [1], [0, 0, 1, 1], [], []>} : vector<8x32xbf16>, vector<32x128xbf16>, vector<8x128xf32> -> vector<8x128xf32>
    %c0_3 = arith.constant 0 : index
    %c0_4 = arith.constant 0 : index
    %4 = vector.load %arg3[%c0_3, %c0_4] : memref<1x128xf32, #tpu.memory_space<vmem>>, vector<1x128xf32>
    %5 = vector.broadcast %4 : vector<1x128xf32> to vector<8x128xf32>
    %6 = arith.addf %3, %5 : vector<8x128xf32>
    %cst_5 = arith.constant 0.000000e+00 : f32
    %7 = vector.broadcast %cst_5 : f32 to vector<8x128xf32>
    %8 = arith.maximumf %6, %7 : vector<8x128xf32>
    %9 = arith.truncf %8 : vector<8x128xf32> to vector<8x128xbf16>
    %c0_6 = arith.constant 0 : index
    %c0_7 = arith.constant 0 : index
    %10 = vector.load %arg4[%c0_6, %c0_7] : memref<128x128xbf16, #tpu.memory_space<vmem>>, vector<128x128xbf16>
    %cst_8 = arith.constant dense<0.000000e+00> : vector<8x128xf32>
    %11 = tpu.matmul %9, %10, %cst_8 {dimension_numbers = #tpu.dot_dimension_numbers<[1], [0], [0], [1], [0, 0, 1, 1], [], []>} : vector<8x128xbf16>, vector<128x128xbf16>, vector<8x128xf32> -> vector<8x128xf32>
    %c0_9 = arith.constant 0 : index
    %c0_10 = arith.constant 0 : index
    %12 = vector.load %arg5[%c0_9, %c0_10] : memref<1x128xf32, #tpu.memory_space<vmem>>, vector<1x128xf32>
    %13 = vector.broadcast %12 : vector<1x128xf32> to vector<8x128xf32>
    %14 = arith.addf %11, %13 : vector<8x128xf32>
    %c0_11 = arith.constant 0 : index
    %c0_12 = arith.constant 0 : index
    %15 = vector.load %arg6[%c0_11, %c0_12] : memref<8x128xf32, #tpu.memory_space<vmem>>, vector<8x128xf32>
    tpu.vector_store %arg6[%c0_11, %c0_12], %14 {strides = array<i32>} : memref<8x128xf32, #tpu.memory_space<vmem>>, vector<8x128xf32>,
    return
  }
  func.func @transform_0(%arg0: i32) -> (i32, i32) {
    %c0_i32 = arith.constant 0 : i32
    %c0_i32_0 = arith.constant 0 : i32
    return %arg0, %c0_i32 : i32, i32
  }
  func.func @transform_1(%arg0: i32) -> (i32, i32) {
    %c0_i32 = arith.constant 0 : i32
    %c0_i32_0 = arith.constant 0 : i32
    %c0_i32_1 = arith.constant 0 : i32
    return %c0_i32, %c0_i32_0 : i32, i32
  }
  func.func @transform_2(%arg0: i32) -> (i32, i32) {
    %c0_i32 = arith.constant 0 : i32
    %c0_i32_0 = arith.constant 0 : i32
    %c0_i32_1 = arith.constant 0 : i32
    return %c0_i32, %c0_i32_0 : i32, i32
  }
  func.func @transform_3(%arg0: i32) -> (i32, i32) {
    %c0_i32 = arith.constant 0 : i32
    %c0_i32_0 = arith.constant 0 : i32
    %c0_i32_1 = arith.constant 0 : i32
    return %c0_i32, %c0_i32_0 : i32, i32
  }
  func.func @transform_4(%arg0: i32) -> (i32, i32) {
    %c0_i32 = arith.constant 0 : i32
    %c0_i32_0 = arith.constant 0 : i32
    %c0_i32_1 = arith.constant 0 : i32
    return %c0_i32, %c0_i32_0 : i32, i32
  }
  func.func @transform_5(%arg0: i32) -> (i32, i32) {
    %c0_i32 = arith.constant 0 : i32
    %c0_i32_0 = arith.constant 0 : i32
    return %arg0, %c0_i32 : i32, i32
  }
}

</mosaic_0001>

<llo_original>
// kernel: tpu_custom_call.1
$region0: #{tpu_custom_call.1}
  #allocation0 [shape = 'u32[]', space=smem, size = 0x4, offset = 0x4, fixed_abs, tag = 'smem constant byte address 0x4 - core index']
  #allocation1 [shape = 'u32[72,128]{1,0:T(1,128)}', space=vmem, size = 0x9000, scoped, tag = 'internal scratch']
  %s0 = inlined_call_operand.hbm [shape: f32[8,32], index: 0, kind: input, shape index: {}]
  %s1 = inlined_call_operand.hbm [shape: bf16[32,128], index: 1, kind: input, shape index: {}]
  %s2 = inlined_call_operand.vmem [shape: f32[1,128], index: 2, kind: input, shape index: {}]
  %s3 = inlined_call_operand.hbm [shape: bf16[128,128], index: 3, kind: input, shape index: {}]
  %s4 = inlined_call_operand.vmem [shape: f32[1,128], index: 4, kind: input, shape index: {}]
  %s5 = inlined_call_operand.hbm [shape: f32[8,128], index: 5, kind: output, shape index: {}]
  %s6 = sld [smem:[#allocation0]]
  $region42: #{tpu_custom_call.1} parent=0
    _
  %s8 = ssub.s32 1, %s6
  %s9 = scalar_select 0, %s8, %s6
  $region1: #{tpu_custom_call.1} parent=0
    #allocation2 [shape = 'u8[4096]{0}', space=vmem, size = 0x1000, scoped, tag = 'input window, operand 0, single buffered']
    #allocation3 [shape = 's32[1]{0}', space=sflag, size = 0x4, scoped, tag = 'scoped memory for tpu_custom_call.1']
    #allocation4 [shape = 's32[1]{0}', space=sflag, size = 0x4, scoped, tag = 'scoped memory for tpu_custom_call.1']
    #allocation5 [shape = 'u8[8192]{0}', space=vmem, size = 0x2000, scoped, tag = 'input window, operand 1, single buffered']
    #allocation6 [shape = 's32[1]{0}', space=sflag, size = 0x4, scoped, tag = 'scoped memory for tpu_custom_call.1']
    #allocation7 [shape = 'u8[32768]{0}', space=vmem, size = 0x8000, scoped, tag = 'input window, operand 3, single buffered']
    #allocation8 [shape = 'u8[4096]{0}', space=vmem, size = 0x1000, scoped, tag = 'output window, operand 0, single buffered']
    %10 = vsyncpa [#allocation3], 0
    %11 = vsyncpa [#allocation6], 0
    %12 = vsyncpa [#allocation4], 0
    // Predicated region
    $region2: #{tpu_custom_call.1} parent=1 // pred_check
      _
    $region3: #{tpu_custom_call.1} parent=1 // pred_check_branch
      %14 = sbr.rel (0) target = $region5
    $region4: #{tpu_custom_call.1} parent=1 // pred_region
      %16 = vsyncadd [#allocation3], 0
      %s18 = sshll.u32 %s0, 4
      %s19 = int_to_ptr.hbm [resolvable:$true] %s18
      %s20 = sshll.u32 [#allocation2], 4
      %s21 = int_to_ptr.vmem [resolvable:$true] %s20
      %23 = dma.hbm_to_vmem [thread:$0]  %s19, 128, %s21, [#allocation3]
    $region5: #{tpu_custom_call.1} parent=1 // pred_fallthru
      _
    // Predicated region
    $region6: #{tpu_custom_call.1} parent=1 // pred_check
      _
    $region7: #{tpu_custom_call.1} parent=1 // pred_check_branch
      %25 = sbr.rel (0) target = $region9
    $region8: #{tpu_custom_call.1} parent=1 // pred_region
      %27 = vsyncadd [#allocation6], 0
      %s28 = sshll.u32 %s1, 4
      %s29 = int_to_ptr.hbm [resolvable:$true] %s28
      %s30 = sshll.u32 [#allocation5], 4
      %s31 = int_to_ptr.vmem [resolvable:$true] %s30
      %36 = dma.hbm_to_vmem [thread:$0]  %s29, 256, %s31, [#allocation6], 64, 64, 4
    $region9: #{tpu_custom_call.1} parent=1 // pred_fallthru
      _
    // Predicated region
    $region10: #{tpu_custom_call.1} parent=1 // pred_check
      _
    $region11: #{tpu_custom_call.1} parent=1 // pred_check_branch
      %38 = sbr.rel (0) target = $region13
    $region12: #{tpu_custom_call.1} parent=1 // pred_region
      _
    $region13: #{tpu_custom_call.1} parent=1 // pred_fallthru
      _
    // Predicated region
    $region14: #{tpu_custom_call.1} parent=1 // pred_check
      _
    $region15: #{tpu_custom_call.1} parent=1 // pred_check_branch
      %40 = sbr.rel (0) target = $region17
    $region16: #{tpu_custom_call.1} parent=1 // pred_region
      %42 = vsyncadd [#allocation6], 0
      %s43 = sshll.u32 %s3, 4
      %s44 = int_to_ptr.hbm [resolvable:$true] %s43
      %s45 = sshll.u32 [#allocation7], 4
      %s46 = int_to_ptr.vmem [resolvable:$true] %s45
      %51 = dma.hbm_to_vmem [thread:$0]  %s44, 1024, %s46, [#allocation6], 64, 64, 4
    $region17: #{tpu_custom_call.1} parent=1 // pred_fallthru
      _
    // Predicated region
    $region18: #{tpu_custom_call.1} parent=1 // pred_check
      _
    $region19: #{tpu_custom_call.1} parent=1 // pred_check_branch
      %53 = sbr.rel (0) target = $region21
    $region20: #{tpu_custom_call.1} parent=1 // pred_region
      _
    $region21: #{tpu_custom_call.1} parent=1 // pred_fallthru
      _
    // Predicated region
    $region22: #{tpu_custom_call.1} parent=1 // pred_check
      _
    $region23: #{tpu_custom_call.1} parent=1 // pred_check_branch
      %55 = sbr.rel (0) target = $region25
    $region24: #{tpu_custom_call.1} parent=1 // pred_region
      %57 = dma.done [#allocation3], 128
    $region25: #{tpu_custom_call.1} parent=1 // pred_fallthru
      _
    // Predicated region
    $region26: #{tpu_custom_call.1} parent=1 // pred_check
      _
    $region27: #{tpu_custom_call.1} parent=1 // pred_check_branch
      %59 = sbr.rel (0) target = $region29
    $region28: #{tpu_custom_call.1} parent=1 // pred_region
      %61 = dma.done [#allocation6], 256
    $region29: #{tpu_custom_call.1} parent=1 // pred_fallthru
      _
    // Predicated region
    $region30: #{tpu_custom_call.1} parent=1 // pred_check
      _
    $region31: #{tpu_custom_call.1} parent=1 // pred_check_branch
      %63 = sbr.rel (0) target = $region33
    $region32: #{tpu_custom_call.1} parent=1 // pred_region
      %65 = dma.done [#allocation6], 1024
    $region33: #{tpu_custom_call.1} parent=1 // pred_fallthru
      _
    %v67 = vld [vmem:[#allocation2] sm:$0xff]
    %v68 = vpack.c.bf16 %v67, %v67
    %v69 = vld [vmem:[#allocation5] sm:$0xf]
    %v70 = vld [vmem:[#allocation5 + $0x4] sm:$0xf]
    %v71 = vld [vmem:[#allocation5 + $0x8] sm:$0xf]
    %v72 = vld [vmem:[#allocation5 + $0xc] sm:$0xf]
    %v73 = vld [vmem:[%s2] sm:$0x1]
    %v75 = vperm.slane %v73, 0
    %v81 = vunpack.c.l.b16 %v69
    %v82 = vunpack.c.l.b16 %v70
    %v83 = vunpack.c.l.b16 %v71
    %v84 = vunpack.c.l.b16 %v72
    %v85 = vpack.c.b16 %v82, %v81
    %v86 = vpack.c.b16 %v84, %v83
    %vm89 = vcmask 261120
    %v91 = vsel %vm89, %v68, 0
    %93 = vmatpush.bf16.msra.mxu0 0
    %94 = vmatpush.bf16.msra.mxu0 0
    %95 = vmatpush.bf16.msra.mxu0 0
    %96 = vmatpush.bf16.msra.mxu0 0
    %97 = vmatpush.bf16.msra.mxu0 0
    %98 = vmatpush.bf16.msra.mxu0 0
    %99 = vmatpush.bf16.msra.mxu0 %v86
    %100 = vmatpush.bf16.msra.mxu0 %v85
    %101 = vmatmul.bf16.gmra.mxu0 %v91
    %v102 = vpop.f32.mrf.mxu0
    %v103 = vadd.f32 %v75, %v102
    %v104 = vpop.f32.mrf.mxu0
    %105 = vdwg.mxu0
    %v106 = vmax.f32 %v103, 0.0
    %v107 = vpack.c.bf16 %v106, %v106
    %v108 = vld [vmem:[#allocation7] sm:$0xf]
    %v109 = vld [vmem:[#allocation7 + $0x4] sm:$0xf]
    %v110 = vld [vmem:[#allocation7 + $0x8] sm:$0xf]
    %v111 = vld [vmem:[#allocation7 + $0xc] sm:$0xf]
    %v112 = vld [vmem:[#allocation7 + $0x10] sm:$0xf]
    %v113 = vld [vmem:[#allocation7 + $0x14] sm:$0xf]
    %v114 = vld [vmem:[#allocation7 + $0x18] sm:$0xf]
    %v115 = vld [vmem:[#allocation7 + $0x1c] sm:$0xf]
    %v116 = vld [vmem:[#allocation7 + $0x20] sm:$0xf]
    %v117 = vld [vmem:[#allocation7 + $0x24] sm:$0xf]
    %v118 = vld [vmem:[#allocation7 + $0x28] sm:$0xf]
    %v119 = vld [vmem:[#allocation7 + $0x2c] sm:$0xf]
    %v120 = vld [vmem:[#allocation7 + $0x30] sm:$0xf]
    %v121 = vld [vmem:[#allocation7 + $0x34] sm:$0xf]
    %v122 = vld [vmem:[#allocation7 + $0x38] sm:$0xf]
    %v123 = vld [vmem:[#allocation7 + $0x3c] sm:$0xf]
    %v124 = vld [vmem:[%s4] sm:$0x1]
    %v126 = vperm.slane %v124, 0
    %v144 = vunpack.c.l.b16 %v108
    %v145 = vunpack.c.l.b16 %v109
    %v146 = vunpack.c.l.b16 %v110
    %v147 = vunpack.c.l.b16 %v111
    %v148 = vunpack.c.l.b16 %v112
    %v149 = vunpack.c.l.b16 %v113
    %v150 = vunpack.c.l.b16 %v114
    %v151 = vunpack.c.l.b16 %v115
    %v152 = vunpack.c.l.b16 %v116
    %v153 = vunpack.c.l.b16 %v117
    %v154 = vunpack.c.l.b16 %v118
    %v155 = vunpack.c.l.b16 %v119
    %v156 = vunpack.c.l.b16 %v120
    %v157 = vunpack.c.l.b16 %v121
    %v158 = vunpack.c.l.b16 %v122
    %v159 = vunpack.c.l.b16 %v123
    %v160 = vpack.c.b16 %v145, %v144
    %v161 = vpack.c.b16 %v147, %v146
    %v162 = vpack.c.b16 %v149, %v148
    %v163 = vpack.c.b16 %v151, %v150
    %v164 = vpack.c.b16 %v153, %v152
    %v165 = vpack.c.b16 %v155, %v154
    %v166 = vpack.c.b16 %v157, %v156
    %v167 = vpack.c.b16 %v159, %v158
    %176 = vmatpush.bf16.msra.mxu0 %v167
    %177 = vmatpush.bf16.msra.mxu0 %v166
    %178 = vmatpush.bf16.msra.mxu0 %v165
    %179 = vmatpush.bf16.msra.mxu0 %v164
    %180 = vmatpush.bf16.msra.mxu0 %v163
    %181 = vmatpush.bf16.msra.mxu0 %v162
    %182 = vmatpush.bf16.msra.mxu0 %v161
    %183 = vmatpush.bf16.msra.mxu0 %v160
    %184 = vmatmul.bf16.gmra.mxu0 %v107
    %v185 = vpop.f32.mrf.mxu0
    %v186 = vadd.f32 %v126, %v185
    %v187 = vpop.f32.mrf.mxu0
    %188 = vdwg.mxu0
    %189 = vst [vmem:[#allocation8] sm:$0xff] %v186
    // Predicated region
    $region34: #{tpu_custom_call.1} parent=1 // pred_check
      _
    $region35: #{tpu_custom_call.1} parent=1 // pred_check_branch
      %191 = sbr.rel (0) target = $region37
    $region36: #{tpu_custom_call.1} parent=1 // pred_region
      %193 = vsyncadd [#allocation4], 0
      %s195 = sshll.u32 [#allocation8], 4
      %s196 = int_to_ptr.vmem [resolvable:$true] %s195
      %s197 = sshll.u32 %s5, 4
      %s198 = int_to_ptr.hbm [resolvable:$true] %s197
      %200 = dma.vmem_to_hbm [thread:$0]  %s196, 128, %s198, [#allocation4]
    $region37: #{tpu_custom_call.1} parent=1 // pred_fallthru
      _
    // Predicated region
    $region38: #{tpu_custom_call.1} parent=1 // pred_check
      _
    $region39: #{tpu_custom_call.1} parent=1 // pred_check_branch
      %202 = sbr.rel (0) target = $region41
    $region40: #{tpu_custom_call.1} parent=1 // pred_region
      %204 = dma.done [#allocation4], 128
    $region41: #{tpu_custom_call.1} parent=1 // pred_fallthru
      _
    %205 = vsyncpa [#allocation3], 1
    %206 = vsyncpa [#allocation6], 1
    %207 = vsyncpa [#allocation4], 1

// kernel: tpu_custom_call.1
$region0: #{tpu_custom_call.1}
  #allocation0 [shape = 'u32[]', space=smem, size = 0x4, offset = 0x4, fixed_abs, tag = 'smem constant byte address 0x4 - core index']
  #allocation1 [shape = 'u32[72,128]{1,0:T(1,128)}', space=vmem, size = 0x9000, scoped, tag = 'internal scratch']
  %s0 = inlined_call_operand.hbm [shape: f32[8,32], index: 0, kind: input, shape index: {}]
  %s1 = inlined_call_operand.hbm [shape: bf16[32,128], index: 1, kind: input, shape index: {}]
  %s2 = inlined_call_operand.vmem [shape: f32[1,128], index: 2, kind: input, shape index: {}]
  %s3 = inlined_call_operand.hbm [shape: bf16[128,128], index: 3, kind: input, shape index: {}]
  %s4 = inlined_call_operand.vmem [shape: f32[1,128], index: 4, kind: input, shape index: {}]
  %s5 = inlined_call_operand.hbm [shape: f32[8,128], index: 5, kind: output, shape index: {}]
  %s6 = sld [smem:[#allocation0]]
  $region42: #{tpu_custom_call.1} parent=0
    _
  %s8 = ssub.s32 1, %s6
  %s9 = scalar_select 0, %s8, %s6
  $region1: #{tpu_custom_call.1} parent=0
    #allocation2 [shape = 'u8[4096]{0}', space=vmem, size = 0x1000, scoped, tag = 'input window, operand 0, single buffered']
    #allocation3 [shape = 's32[1]{0}', space=sflag, size = 0x4, scoped, tag = 'scoped memory for tpu_custom_call.1']
    #allocation4 [shape = 's32[1]{0}', space=sflag, size = 0x4, scoped, tag = 'scoped memory for tpu_custom_call.1']
    #allocation5 [shape = 'u8[8192]{0}', space=vmem, size = 0x2000, scoped, tag = 'input window, operand 1, single buffered']
    #allocation6 [shape = 's32[1]{0}', space=sflag, size = 0x4, scoped, tag = 'scoped memory for tpu_custom_call.1']
    #allocation7 [shape = 'u8[32768]{0}', space=vmem, size = 0x8000, scoped, tag = 'input window, operand 3, single buffered']
    #allocation8 [shape = 'u8[4096]{0}', space=vmem, size = 0x1000, scoped, tag = 'output window, operand 0, single buffered']
    %10 = vsyncpa [#allocation3], 0
    %11 = vsyncpa [#allocation6], 0
    %12 = vsyncpa [#allocation4], 0
    // Predicated region
    $region2: #{tpu_custom_call.1} parent=1 // pred_check
      _
    $region3: #{tpu_custom_call.1} parent=1 // pred_check_branch
      %14 = sbr.rel (0) target = $region5
    $region4: #{tpu_custom_call.1} parent=1 // pred_region
      %16 = vsyncadd [#allocation3], 0
      %s18 = sshll.u32 %s0, 4
      %s19 = int_to_ptr.hbm [resolvable:$true] %s18
      %s20 = sshll.u32 [#allocation2], 4
      %s21 = int_to_ptr.vmem [resolvable:$true] %s20
      %23 = dma.hbm_to_vmem [thread:$0]  %s19, 128, %s21, [#allocation3]
    $region5: #{tpu_custom_call.1} parent=1 // pred_fallthru
      _
    // Predicated region
    $region6: #{tpu_custom_call.1} parent=1 // pred_check
      _
    $region7: #{tpu_custom_call.1} parent=1 // pred_check_branch
      %25 = sbr.rel (0) target = $region9
    $region8: #{tpu_custom_call.1} parent=1 // pred_region
      %27 = vsyncadd [#allocation6], 0
      %s28 = sshll.u32 %s1, 4
      %s29 = int_to_ptr.hbm [resolvable:$true] %s28
      %s30 = sshll.u32 [#allocation5], 4
      %s31 = int_to_ptr.vmem [resolvable:$true] %s30
      %36 = dma.hbm_to_vmem [thread:$0]  %s29, 256, %s31, [#allocation6], 64, 64, 4
    $region9: #{tpu_custom_call.1} parent=1 // pred_fallthru
      _
    // Predicated region
    $region10: #{tpu_custom_call.1} parent=1 // pred_check
      _
    $region11: #{tpu_custom_call.1} parent=1 // pred_check_branch
      %38 = sbr.rel (0) target = $region13
    $region12: #{tpu_custom_call.1} parent=1 // pred_region
      _
    $region13: #{tpu_custom_call.1} parent=1 // pred_fallthru
      _
    // Predicated region
    $region14: #{tpu_custom_call.1} parent=1 // pred_check
      _
    $region15: #{tpu_custom_call.1} parent=1 // pred_check_branch
      %40 = sbr.rel (0) target = $region17
    $region16: #{tpu_custom_call.1} parent=1 // pred_region
      %42 = vsyncadd [#allocation6], 0
      %s43 = sshll.u32 %s3, 4
      %s44 = int_to_ptr.hbm [resolvable:$true] %s43
      %s45 = sshll.u32 [#allocation7], 4
      %s46 = int_to_ptr.vmem [resolvable:$true] %s45
      %51 = dma.hbm_to_vmem [thread:$0]  %s44, 1024, %s46, [#allocation6], 64, 64, 4
    $region17: #{tpu_custom_call.1} parent=1 // pred_fallthru
      _
    // Predicated region
    $region18: #{tpu_custom_call.1} parent=1 // pred_check
      _
    $region19: #{tpu_custom_call.1} parent=1 // pred_check_branch
      %53 = sbr.rel (0) target = $region21
    $region20: #{tpu_custom_call.1} parent=1 // pred_region
      _
    $region21: #{tpu_custom_call.1} parent=1 // pred_fallthru
      _
    // Predicated region
    $region22: #{tpu_custom_call.1} parent=1 // pred_check
      _
    $region23: #{tpu_custom_call.1} parent=1 // pred_check_branch
      %55 = sbr.rel (0) target = $region25
    $region24: #{tpu_custom_call.1} parent=1 // pred_region
      %57 = dma.done [#allocation3], 128
    $region25: #{tpu_custom_call.1} parent=1 // pred_fallthru
      _
    // Predicated region
    $region26: #{tpu_custom_call.1} parent=1 // pred_check
      _
    $region27: #{tpu_custom_call.1} parent=1 // pred_check_branch
      %59 = sbr.rel (0) target = $region29
    $region28: #{tpu_custom_call.1} parent=1 // pred_region
      %61 = dma.done [#allocation6], 256
    $region29: #{tpu_custom_call.1} parent=1 // pred_fallthru
      _
    // Predicated region
    $region30: #{tpu_custom_call.1} parent=1 // pred_check
      _
    $region31: #{tpu_custom_call.1} parent=1 // pred_check_branch
      %63 = sbr.rel (0) target = $region33
    $region32: #{tpu_custom_call.1} parent=1 // pred_region
      %65 = dma.done [#allocation6], 1024
    $region33: #{tpu_custom_call.1} parent=1 // pred_fallthru
      _
    %v67 = vld [vmem:[#allocation2] sm:$0xff]
    %v68 = vpack.c.bf16 %v67, %v67
    %v69 = vld [vmem:[#allocation5] sm:$0xf]
    %v70 = vld [vmem:[#allocation5 + $0x4] sm:$0xf]
    %v71 = vld [vmem:[#allocation5 + $0x8] sm:$0xf]
    %v72 = vld [vmem:[#allocation5 + $0xc] sm:$0xf]
    %v73 = vld [vmem:[%s2] sm:$0x1]
    %v75 = vperm.slane %v73, 0
    %v81 = vunpack.c.l.b16 %v69
    %v82 = vunpack.c.l.b16 %v70
    %v83 = vunpack.c.l.b16 %v71
    %v84 = vunpack.c.l.b16 %v72
    %v85 = vpack.c.b16 %v82, %v81
    %v86 = vpack.c.b16 %v84, %v83
    %vm89 = vcmask 261120
    %v91 = vsel %vm89, %v68, 0
    %93 = vmatpush.bf16.msra.mxu0 0
    %94 = vmatpush.bf16.msra.mxu0 0
    %95 = vmatpush.bf16.msra.mxu0 0
    %96 = vmatpush.bf16.msra.mxu0 0
    %97 = vmatpush.bf16.msra.mxu0 0
    %98 = vmatpush.bf16.msra.mxu0 0
    %99 = vmatpush.bf16.msra.mxu0 %v86
    %100 = vmatpush.bf16.msra.mxu0 %v85
    %101 = vmatmul.bf16.gmra.mxu0 %v91
    %v102 = vpop.f32.mrf.mxu0
    %v103 = vadd.f32 %v75, %v102
    %v104 = vpop.f32.mrf.mxu0
    %105 = vdwg.mxu0
    %v106 = vmax.f32 %v103, 0.0
    %v107 = vpack.c.bf16 %v106, %v106
    %v108 = vld [vmem:[#allocation7] sm:$0xf]
    %v109 = vld [vmem:[#allocation7 + $0x4] sm:$0xf]
    %v110 = vld [vmem:[#allocation7 + $0x8] sm:$0xf]
    %v111 = vld [vmem:[#allocation7 + $0xc] sm:$0xf]
    %v112 = vld [vmem:[#allocation7 + $0x10] sm:$0xf]
    %v113 = vld [vmem:[#allocation7 + $0x14] sm:$0xf]
    %v114 = vld [vmem:[#allocation7 + $0x18] sm:$0xf]
    %v115 = vld [vmem:[#allocation7 + $0x1c] sm:$0xf]
    %v116 = vld [vmem:[#allocation7 + $0x20] sm:$0xf]
    %v117 = vld [vmem:[#allocation7 + $0x24] sm:$0xf]
    %v118 = vld [vmem:[#allocation7 + $0x28] sm:$0xf]
    %v119 = vld [vmem:[#allocation7 + $0x2c] sm:$0xf]
    %v120 = vld [vmem:[#allocation7 + $0x30] sm:$0xf]
    %v121 = vld [vmem:[#allocation7 + $0x34] sm:$0xf]
    %v122 = vld [vmem:[#allocation7 + $0x38] sm:$0xf]
    %v123 = vld [vmem:[#allocation7 + $0x3c] sm:$0xf]
    %v124 = vld [vmem:[%s4] sm:$0x1]
    %v126 = vperm.slane %v124, 0
    %v144 = vunpack.c.l.b16 %v108
    %v145 = vunpack.c.l.b16 %v109
    %v146 = vunpack.c.l.b16 %v110
    %v147 = vunpack.c.l.b16 %v111
    %v148 = vunpack.c.l.b16 %v112
    %v149 = vunpack.c.l.b16 %v113
    %v150 = vunpack.c.l.b16 %v114
    %v151 = vunpack.c.l.b16 %v115
    %v152 = vunpack.c.l.b16 %v116
    %v153 = vunpack.c.l.b16 %v117
    %v154 = vunpack.c.l.b16 %v118
    %v155 = vunpack.c.l.b16 %v119
    %v156 = vunpack.c.l.b16 %v120
    %v157 = vunpack.c.l.b16 %v121
    %v158 = vunpack.c.l.b16 %v122
    %v159 = vunpack.c.l.b16 %v123
    %v160 = vpack.c.b16 %v145, %v144
    %v161 = vpack.c.b16 %v147, %v146
    %v162 = vpack.c.b16 %v149, %v148
    %v163 = vpack.c.b16 %v151, %v150
    %v164 = vpack.c.b16 %v153, %v152
    %v165 = vpack.c.b16 %v155, %v154
    %v166 = vpack.c.b16 %v157, %v156
    %v167 = vpack.c.b16 %v159, %v158
    %176 = vmatpush.bf16.msra.mxu0 %v167
    %177 = vmatpush.bf16.msra.mxu0 %v166
    %178 = vmatpush.bf16.msra.mxu0 %v165
    %179 = vmatpush.bf16.msra.mxu0 %v164
    %180 = vmatpush.bf16.msra.mxu0 %v163
    %181 = vmatpush.bf16.msra.mxu0 %v162
    %182 = vmatpush.bf16.msra.mxu0 %v161
    %183 = vmatpush.bf16.msra.mxu0 %v160
    %184 = vmatmul.bf16.gmra.mxu0 %v107
    %v185 = vpop.f32.mrf.mxu0
    %v186 = vadd.f32 %v126, %v185
    %v187 = vpop.f32.mrf.mxu0
    %188 = vdwg.mxu0
    %189 = vst [vmem:[#allocation8] sm:$0xff] %v186
    // Predicated region
    $region34: #{tpu_custom_call.1} parent=1 // pred_check
      _
    $region35: #{tpu_custom_call.1} parent=1 // pred_check_branch
      %191 = sbr.rel (0) target = $region37
    $region36: #{tpu_custom_call.1} parent=1 // pred_region
      %193 = vsyncadd [#allocation4], 0
      %s195 = sshll.u32 [#allocation8], 4
      %s196 = int_to_ptr.vmem [resolvable:$true] %s195
      %s197 = sshll.u32 %s5, 4
      %s198 = int_to_ptr.hbm [resolvable:$true] %s197
      %200 = dma.vmem_to_hbm [thread:$0]  %s196, 128, %s198, [#allocation4]
    $region37: #{tpu_custom_call.1} parent=1 // pred_fallthru
      _
    // Predicated region
    $region38: #{tpu_custom_call.1} parent=1 // pred_check
      _
    $region39: #{tpu_custom_call.1} parent=1 // pred_check_branch
      %202 = sbr.rel (0) target = $region41
    $region40: #{tpu_custom_call.1} parent=1 // pred_region
      %204 = dma.done [#allocation4], 128
    $region41: #{tpu_custom_call.1} parent=1 // pred_fallthru
      _
    %205 = vsyncpa [#allocation3], 1
    %206 = vsyncpa [#allocation6], 1
    %207 = vsyncpa [#allocation4], 1

</llo_original>
